<compile_context>
chip_gen: v7x
topology: tpu7x:2x2x1
jax: 0.10.0
libtpu: 0.0.40
codegen_flags: <defaults>
</compile_context>

<pallas_src>
import functools

import jax
import jax.numpy as jnp
from jax.experimental import pallas as pl
from jax.experimental.pallas import tpu as pltpu


def _round_up(x, m):
    return ((x + m - 1) // m) * m


def _nbytes(x):
    return int(x.size) * int(x.dtype.itemsize)


def _gates_to_hc(gates, c_prev, H):
    """PyTorch LSTM gate order (i, f, g, o) along the 4H axis."""
    # TODO(synk): if H is not a multiple of 128, pre-permute the 4H gate columns at
    # init so these slices are 128-lane aligned (irrelevant at the demo H=32).
    i_g = jax.nn.sigmoid(gates[:, 0:H])
    f_g = jax.nn.sigmoid(gates[:, H:2 * H])
    g_g = jnp.tanh(gates[:, 2 * H:3 * H])
    o_g = jax.nn.sigmoid(gates[:, 3 * H:4 * H])
    c_new = f_g * c_prev + i_g * g_g
    h_new = o_g * jnp.tanh(c_new)
    return h_new, c_new


def _recurrent_kernel(n_layers, *refs):
    """Attention + stacked-LSTM single decode step (grid-less, VMEM resident)."""
    (emb_ref, h_ref, c_ref, enc_ref, keys_ref, mask_ref,
     wa_ref, ba_ref, va_ref,
     wih0e_ref, wih0c_ref, whh0_ref, b0_ref) = refs[:13]
    idx = 13
    lstm_refs = []
    for _ in range(n_layers - 1):
        lstm_refs.append(refs[idx:idx + 3])
        idx += 3
    h_out_ref, c_out_ref, attn_ref, xtop_ref = refs[idx:idx + 4]

    H = h_ref.shape[2]
    f32 = jnp.float32
    bf16 = jnp.bfloat16

    # ---- Bahdanau additive attention, lane-dense [B, S] score layout ----
    h_top = h_ref[n_layers - 1]                                          # [B, H] f32
    q = jnp.dot(h_top.astype(bf16), wa_ref[...],
                preferred_element_type=f32) + ba_ref[...]                # [B, H] f32
    # keys = enc @ Ua + ub precomputed once per sequence (bf16 -> f32 here).
    t = jnp.tanh(keys_ref[...].astype(f32) + q[:, None, :])              # [B, S, H]
    e = jnp.sum(t * va_ref[...], axis=-1)                                # [B, S]

    maskf = mask_ref[...]                                                # [B, S] f32
    scores = jnp.where(maskf > 0.0, e, jnp.float32(-1e30))
    m = jnp.max(scores, axis=-1, keepdims=True)                          # [B, 1]
    p = jnp.exp(scores - m) * maskf                                      # [B, S]
    denom = jnp.maximum(jnp.sum(p, axis=-1, keepdims=True),
                        jnp.float32(1e-20))                              # [B, 1]
    attn = p / denom                                                     # exact softmax
    attn_ref[...] = attn

    # context vector: sum_s attn[b,s] * enc[b,s,:]  -> [B, H]
    context = jnp.sum(attn[:, :, None] * enc_ref[...].astype(f32), axis=1)

    # ---- stacked LSTM, single time step ----
    # Layer 0: the [emb ; context] concat is avoided by the pre-split W_ih0
    # (embedding part first, context part second -- matches torch.cat order).
    gates = (jnp.dot(emb_ref[...], wih0e_ref[...],
                     preferred_element_type=f32)
             + jnp.dot(context.astype(bf16), wih0c_ref[...],
                       preferred_element_type=f32)
             + jnp.dot(h_ref[0].astype(bf16), whh0_ref[...],
                       preferred_element_type=f32)
             + b0_ref[...])                                              # [B, 4H]
    h_new, c_new = _gates_to_hc(gates, c_ref[0], H)
    h_out_ref[0] = h_new
    c_out_ref[0] = c_new
    x = h_new

    for l in range(1, n_layers):
        wih_ref, whh_ref, b_ref = lstm_refs[l - 1]
        gates = (jnp.dot(x.astype(bf16), wih_ref[...],
                         preferred_element_type=f32)
                 + jnp.dot(h_ref[l].astype(bf16), whh_ref[...],
                           preferred_element_type=f32)
                 + b_ref[...])
        h_new, c_new = _gates_to_hc(gates, c_ref[l], H)
        h_out_ref[l] = h_new
        c_out_ref[l] = c_new
        x = h_new  # recurrent_dropout = 0 -> identity

    xtop_ref[...] = x.astype(bf16)   # feed kernel 2 directly, no XLA round trip


def _proj_kernel(x_ref, w_ref, b_ref, o_ref):
    """One V-tile of the output projection: logit_tile = x @ Wfc_tile + b_tile."""
    o_ref[...] = (jnp.dot(x_ref[...], w_ref[...],
                          preferred_element_type=jnp.float32)
                  + b_ref[...])


# --------------------------------------------------------------------------- #
# one-time / once-per-sequence preparation (hoisted out of the per-step path)  #
# --------------------------------------------------------------------------- #
def _choose_tile_v(H, V):
    # Target wide lane-dense tiles (sweep 1024-4096 on real shapes), but cap so
    # double-buffered bf16 weight tiles stay within ~24 MiB (v7x 64 MiB VMEM).
    cap_by_vmem = max(128, (((24 * 2 ** 20) // (H * 2 * 2)) // 128) * 128)
    return max(128, min(2048, cap_by_vmem, _round_up(V, 128)))


def prepare_params(params):
    """One-time prep of decoder parameters (bf16 casts, splits, folds, fc pad)."""
    bf16 = jnp.bfloat16
    V, E = params['embedding'].shape
    H = params['wa'].shape[0]
    L = sum(1 for k in params if k.startswith('wih'))

    prep = {
        'n_layers': L,
        'emb_table_bf': params['embedding'].astype(bf16),
        'wa_bf': params['wa'].astype(bf16),
        'ba': params['ba'],
        'va': params['va'],
        'ua': params['ua'],
        'ub': params['ub'],
        'wih0e_bf': params['wih0'][:E].astype(bf16),   # embedding half
        'wih0c_bf': params['wih0'][E:].astype(bf16),   # context half
        'whh0_bf': params['whh0'].astype(bf16),
        'b0': params['bih0'] + params['bhh0'],
    }
    for l in range(1, L):
        prep[f'wih{l}_bf'] = params[f'wih{l}'].astype(bf16)
        prep[f'whh{l}_bf'] = params[f'whh{l}'].astype(bf16)
        prep[f'b{l}'] = params[f'bih{l}'] + params[f'bhh{l}']

    tile_v = _choose_tile_v(H, V)
    Vp = _round_up(V, tile_v)
    wfc_bf = params['wfc'].astype(bf16)
    bfc = params['bfc']
    if Vp != V:
        wfc_bf = jnp.pad(wfc_bf, ((0, 0), (0, Vp - V)))
        bfc = jnp.pad(bfc, ((0, 0), (0, Vp - V)))
    prep['wfc_bf'] = wfc_bf
    prep['bfc'] = bfc
    prep['tile_v'] = tile_v
    prep['vocab'] = V
    return prep


def prepare_encoder(prep, enc_outputs, mask):
    """Once-per-sequence prep (constant across decode steps)."""
    f32 = jnp.float32
    bf16 = jnp.bfloat16
    keys = jnp.einsum('sbh,hk->sbk', enc_outputs, prep['ua']) + prep['ub']  # [S,B,H]
    return {
        'enc_bf': jnp.transpose(enc_outputs, (1, 0, 2)).astype(bf16),   # [B, S, H]
        'keys_bf': jnp.transpose(keys, (1, 0, 2)).astype(bf16),         # [B, S, H]
        'mask_f': mask.astype(f32),                                     # [B, S]
    }


# --------------------------------------------------------------------------- #
# per-step forward                                                             #
# --------------------------------------------------------------------------- #
def badhanau_decoder_step(prep, enc_prep, input_word_index, h_state, c_state):
    """Returns (logit[B,V], (h_state[L,B,H], c_state[L,B,H], attn[S,B]))."""
    L, B, H = h_state.shape
    S = enc_prep['mask_f'].shape[1]

    # Embedding gather (plain XLA gather, bf16 table -> half the gather bytes);
    # embedding_dropout = 0 -> identity.
    emb = jnp.take(prep['emb_table_bf'], input_word_index, axis=0)          # [B, E]

    ins = [emb, h_state, c_state,
           enc_prep['enc_bf'], enc_prep['keys_bf'], enc_prep['mask_f'],
           prep['wa_bf'], prep['ba'], prep['va'],
           prep['wih0e_bf'], prep['wih0c_bf'], prep['whh0_bf'], prep['b0']]
    for l in range(1, L):
        ins += [prep[f'wih{l}_bf'], prep[f'whh{l}_bf'], prep[f'b{l}']]

    vmem = pl.BlockSpec(memory_space=pltpu.MemorySpace.VMEM)

    # ---- kernel 1: attention + LSTM state update (grid-less) ----
    k1_out_bytes = 2 * L * B * H * 4 + B * S * 4 + B * H * 2
    k1_bytes = sum(_nbytes(x) for x in ins) + k1_out_bytes
    vmem_limit_k1 = int(max(32 << 20, min(56 << 20, 2 * k1_bytes + (2 << 20))))

    h_new, c_new, attn_bs, x_top_bf = pl.pallas_call(
        functools.partial(_recurrent_kernel, L),
        out_shape=(jax.ShapeDtypeStruct((L, B, H), jnp.float32),
                   jax.ShapeDtypeStruct((L, B, H), jnp.float32),
                   jax.ShapeDtypeStruct((B, S), jnp.float32),
                   jax.ShapeDtypeStruct((B, H), jnp.bfloat16)),
        in_specs=[vmem] * len(ins),
        out_specs=(vmem, vmem, vmem, vmem),
        compiler_params=pltpu.CompilerParams(vmem_limit_bytes=vmem_limit_k1),
    )(*ins)

    # ---- kernel 2: output projection, V tiled over a parallel grid ----
    TILE_V = prep['tile_v']
    V = prep['vocab']
    Vp = prep['wfc_bf'].shape[1]

    k2_bytes = (H * TILE_V * 2) * 2 + (B * TILE_V * 4) * 2 \
        + (TILE_V * 4) * 2 + (B * H * 2) * 2
    vmem_limit_k2 = int(max(32 << 20, min(56 << 20, 2 * k2_bytes + (2 << 20))))

    logit_p = pl.pallas_call(
        _proj_kernel,
        out_shape=jax.ShapeDtypeStruct((B, Vp), jnp.float32),
        grid=(Vp // TILE_V,),
        in_specs=[pl.BlockSpec((B, H), lambda j: (0, 0)),
                  pl.BlockSpec((H, TILE_V), lambda j: (0, j)),
                  pl.BlockSpec((1, TILE_V), lambda j: (0, j))],
        out_specs=pl.BlockSpec((B, TILE_V), lambda j: (0, j)),
        compiler_params=pltpu.CompilerParams(
            dimension_semantics=("parallel",),
            vmem_limit_bytes=vmem_limit_k2),
    )(x_top_bf, prep['wfc_bf'], prep['bfc'])

    logit = logit_p[:, :V]
    attn_sb = attn_bs.T                # module returns attention as [S, B]
    return logit, (h_new, c_new, attn_sb)


# --------------------------------------------------------------------------- #
# parameter init (matches the PyTorch module's parameterisation)               #
# --------------------------------------------------------------------------- #
def init_params(key, vocab_size, embedding_size, hidden_size, n_layers):
    n_keys = 9 + 4 * n_layers
    keys = iter(jax.random.split(key, n_keys))

    def u(shape, scale=0.1):
        return jax.random.uniform(next(keys), shape, jnp.float32, -scale, scale)

    p = {}
    p['embedding'] = u((vocab_size, embedding_size))
    # Bahdanau attention (weights stored as [in, out]):
    p['wa'] = u((hidden_size, hidden_size))
    p['ba'] = u((1, hidden_size))
    p['ua'] = u((hidden_size, hidden_size))
    p['ub'] = u((1, hidden_size))
    p['va'] = u((1, hidden_size))
    p['vb'] = u((1, 1))   # score-layer bias: shift-invariant under softmax -> unused
    # LSTM layers (weights stored transposed: [input, 4H], [H, 4H]):
    for l in range(n_layers):
        in_size = embedding_size + hidden_size if l == 0 else hidden_size
        p[f'wih{l}'] = u((in_size, 4 * hidden_size))
        p[f'whh{l}'] = u((hidden_size, 4 * hidden_size))
        p[f'bih{l}'] = u((1, 4 * hidden_size))
        p[f'bhh{l}'] = u((1, 4 * hidden_size))
    # output projection (stored as [H, V]):
    p['wfc'] = u((hidden_size, vocab_size))
    p['bfc'] = u((1, vocab_size))
    return p


if __name__ == "__main__":
    B, S = 2, 8
    E, H, V, L = 16, 32, 64, 2

    key = jax.random.PRNGKey(0)
    kp, kidx, kh, kc, kenc = jax.random.split(key, 5)

    params = init_params(kp, V, E, H, L)
    input_word_index = jax.random.randint(kidx, (B,), 0, V, dtype=jnp.int32)
    h_state = 0.1 * jax.random.normal(kh, (L, B, H), jnp.float32)
    c_state = 0.1 * jax.random.normal(kc, (L, B, H), jnp.float32)
    enc_outputs = 0.1 * jax.random.normal(kenc, (S, B, H), jnp.float32)
    # mask: batch element 0 fully valid; batch element 1 padded in last 3 positions.
    mask = jnp.ones((B, S), dtype=jnp.bool_).at[1, 5:].set(False)

    prep = prepare_params(params)            # one-time weight prep
    enc_prep = prepare_encoder(prep, enc_outputs, mask)   # once per sequence

    logit, (h_new, c_new, attn) = badhanau_decoder_step(
        prep, enc_prep, input_word_index, h_state, c_state)
    jax.block_until_ready((logit, h_new, c_new, attn))

    assert logit.shape == (B, V)
    assert h_new.shape == (L, B, H) and c_new.shape == (L, B, H)
    assert attn.shape == (S, B)
    assert bool(jnp.all(jnp.isfinite(logit)))
    assert bool(jnp.all(jnp.isfinite(h_new))) and bool(jnp.all(jnp.isfinite(c_new)))
    assert bool(jnp.allclose(attn.sum(axis=0), 1.0, atol=1e-3))   # softmax normalised
    assert bool(jnp.all(attn[5:, 1] == 0.0))                      # mask respected
    print("KERNEL_OK")
</pallas_src>

<mosaic_0001>
module attributes {stable_mosaic.version = 11 : i64} {
  func.func @_recurrent_kernel(%arg0: memref<2x16xbf16, #tpu.memory_space<vmem>>, %arg1: memref<2x2x32xf32, #tpu.memory_space<vmem>>, %arg2: memref<2x2x32xf32, #tpu.memory_space<vmem>>, %arg3: memref<2x8x32xbf16, #tpu.memory_space<vmem>>, %arg4: memref<2x8x32xbf16, #tpu.memory_space<vmem>>, %arg5: memref<2x8xf32, #tpu.memory_space<vmem>>, %arg6: memref<32x32xbf16, #tpu.memory_space<vmem>>, %arg7: memref<1x32xf32, #tpu.memory_space<vmem>>, %arg8: memref<1x32xf32, #tpu.memory_space<vmem>>, %arg9: memref<16x128xbf16, #tpu.memory_space<vmem>>, %arg10: memref<32x128xbf16, #tpu.memory_space<vmem>>, %arg11: memref<32x128xbf16, #tpu.memory_space<vmem>>, %arg12: memref<1x128xf32, #tpu.memory_space<vmem>>, %arg13: memref<32x128xbf16, #tpu.memory_space<vmem>>, %arg14: memref<32x128xbf16, #tpu.memory_space<vmem>>, %arg15: memref<1x128xf32, #tpu.memory_space<vmem>>, %arg16: memref<2x2x32xf32, #tpu.memory_space<vmem>>, %arg17: memref<2x2x32xf32, #tpu.memory_space<vmem>>, %arg18: memref<2x8xf32, #tpu.memory_space<vmem>>, %arg19: memref<2x32xbf16, #tpu.memory_space<vmem>>) attributes {dimension_semantics = [], scalar_prefetch = 0 : i64, scratch_operands = 0 : i64, tpu.core_type = #tpu.core_type<tc>} {
    %c1 = arith.constant 1 : index
    %c0 = arith.constant 0 : index
    %c0_0 = arith.constant 0 : index
    %0 = vector.load %arg1[%c1, %c0, %c0_0] : memref<2x2x32xf32, #tpu.memory_space<vmem>>, vector<1x2x32xf32>
    %1 = vector.shape_cast %0 : vector<1x2x32xf32> to vector<2x32xf32>
    %2 = arith.truncf %1 : vector<2x32xf32> to vector<2x32xbf16>
    %c0_1 = arith.constant 0 : index
    %c0_2 = arith.constant 0 : index
    %3 = vector.load %arg6[%c0_1, %c0_2] : memref<32x32xbf16, #tpu.memory_space<vmem>>, vector<32x32xbf16>
    %cst = arith.constant dense<0.000000e+00> : vector<2x32xf32>
    %4 = tpu.matmul %2, %3, %cst {dimension_numbers = #tpu.dot_dimension_numbers<[1], [0], [0], [1], [0, 0, 1, 1], [], []>} : vector<2x32xbf16>, vector<32x32xbf16>, vector<2x32xf32> -> vector<2x32xf32>
    %c0_3 = arith.constant 0 : index
    %c0_4 = arith.constant 0 : index
    %5 = vector.load %arg7[%c0_3, %c0_4] : memref<1x32xf32, #tpu.memory_space<vmem>>, vector<1x32xf32>
    %6 = vector.broadcast %5 : vector<1x32xf32> to vector<2x32xf32>
    %7 = arith.addf %4, %6 : vector<2x32xf32>
    %c0_5 = arith.constant 0 : index
    %c0_6 = arith.constant 0 : index
    %c0_7 = arith.constant 0 : index
    %8 = vector.load %arg4[%c0_5, %c0_6, %c0_7] : memref<2x8x32xbf16, #tpu.memory_space<vmem>>, vector<2x8x32xbf16>
    %9 = arith.extf %8 : vector<2x8x32xbf16> to vector<2x8x32xf32>
    %10 = vector.shape_cast %7 : vector<2x32xf32> to vector<2x1x32xf32>
    %11 = vector.broadcast %10 : vector<2x1x32xf32> to vector<2x8x32xf32>
    %12 = arith.addf %9, %11 : vector<2x8x32xf32>
    %13 = math.tanh %12 : vector<2x8x32xf32>
    %c0_8 = arith.constant 0 : index
    %c0_9 = arith.constant 0 : index
    %14 = vector.load %arg8[%c0_8, %c0_9] : memref<1x32xf32, #tpu.memory_space<vmem>>, vector<1x32xf32>
    %15 = vector.shape_cast %14 : vector<1x32xf32> to vector<1x1x32xf32>
    %16 = vector.broadcast %15 : vector<1x1x32xf32> to vector<2x8x32xf32>
    %17 = arith.mulf %13, %16 : vector<2x8x32xf32>
    %cst_10 = arith.constant dense<0.000000e+00> : vector<2x8xf32>
    %18 = vector.multi_reduction <add>, %17, %cst_10 [2] : vector<2x8x32xf32> to vector<2x8xf32>
    %c0_11 = arith.constant 0 : index
    %c0_12 = arith.constant 0 : index
    %19 = vector.load %arg5[%c0_11, %c0_12] : memref<2x8xf32, #tpu.memory_space<vmem>>, vector<2x8xf32>
    %cst_13 = arith.constant 0.000000e+00 : f32
    %20 = vector.broadcast %cst_13 : f32 to vector<2x8xf32>
    %21 = arith.cmpf ogt, %19, %20 : vector<2x8xf32>
    %cst_14 = arith.constant -1.000000e+30 : f32
    %22 = vector.broadcast %cst_14 : f32 to vector<2x8xf32>
    %23 = arith.select %21, %18, %22 : vector<2x8xi1>, vector<2x8xf32>
    %cst_15 = arith.constant dense<0xFF800000> : vector<2xf32>
    %24 = vector.multi_reduction <maximumf>, %23, %cst_15 [1] : vector<2x8xf32> to vector<2xf32>
    %25 = vector.shape_cast %24 : vector<2xf32> to vector<2x1xf32>
    %26 = vector.broadcast %25 : vector<2x1xf32> to vector<2x8xf32>
    %27 = arith.subf %23, %26 : vector<2x8xf32>
    %28 = math.exp %27 : vector<2x8xf32>
    %29 = arith.mulf %28, %19 : vector<2x8xf32>
    %cst_16 = arith.constant dense<0.000000e+00> : vector<2xf32>
    %30 = vector.multi_reduction <add>, %29, %cst_16 [1] : vector<2x8xf32> to vector<2xf32>
    %31 = vector.shape_cast %30 : vector<2xf32> to vector<2x1xf32>
    %cst_17 = arith.constant 9.99999968E-21 : f32
    %32 = vector.broadcast %cst_17 : f32 to vector<2x1xf32>
    %33 = arith.maximumf %31, %32 : vector<2x1xf32>
    %34 = vector.broadcast %33 : vector<2x1xf32> to vector<2x8xf32>
    %35 = arith.divf %29, %34 : vector<2x8xf32>
    %c0_18 = arith.constant 0 : index
    %c0_19 = arith.constant 0 : index
    %36 = vector.load %arg18[%c0_18, %c0_19] : memref<2x8xf32, #tpu.memory_space<vmem>>, vector<2x8xf32>
    tpu.vector_store %arg18[%c0_18, %c0_19], %35 {strides = array<i32>} : memref<2x8xf32, #tpu.memory_space<vmem>>, vector<2x8xf32>,
    %37 = vector.shape_cast %35 : vector<2x8xf32> to vector<2x8x1xf32>
    %c0_20 = arith.constant 0 : index
    %c0_21 = arith.constant 0 : index
    %c0_22 = arith.constant 0 : index
    %38 = vector.load %arg3[%c0_20, %c0_21, %c0_22] : memref<2x8x32xbf16, #tpu.memory_space<vmem>>, vector<2x8x32xbf16>
    %39 = arith.extf %38 : vector<2x8x32xbf16> to vector<2x8x32xf32>
    %40 = vector.broadcast %37 : vector<2x8x1xf32> to vector<2x8x32xf32>
    %41 = arith.mulf %40, %39 : vector<2x8x32xf32>
    %cst_23 = arith.constant dense<0.000000e+00> : vector<2x32xf32>
    %42 = vector.multi_reduction <add>, %41, %cst_23 [1] : vector<2x8x32xf32> to vector<2x32xf32>
    %c0_24 = arith.constant 0 : index
    %c0_25 = arith.constant 0 : index
    %43 = vector.load %arg0[%c0_24, %c0_25] : memref<2x16xbf16, #tpu.memory_space<vmem>>, vector<2x16xbf16>
    %c0_26 = arith.constant 0 : index
    %c0_27 = arith.constant 0 : index
    %44 = vector.load %arg9[%c0_26, %c0_27] : memref<16x128xbf16, #tpu.memory_space<vmem>>, vector<16x128xbf16>
    %cst_28 = arith.constant dense<0.000000e+00> : vector<2x128xf32>
    %45 = tpu.matmul %43, %44, %cst_28 {dimension_numbers = #tpu.dot_dimension_numbers<[1], [0], [0], [1], [0, 0, 1, 1], [], []>} : vector<2x16xbf16>, vector<16x128xbf16>, vector<2x128xf32> -> vector<2x128xf32>
    %46 = arith.truncf %42 : vector<2x32xf32> to vector<2x32xbf16>
    %c0_29 = arith.constant 0 : index
    %c0_30 = arith.constant 0 : index
    %47 = vector.load %arg10[%c0_29, %c0_30] : memref<32x128xbf16, #tpu.memory_space<vmem>>, vector<32x128xbf16>
    %cst_31 = arith.constant dense<0.000000e+00> : vector<2x128xf32>
    %48 = tpu.matmul %46, %47, %cst_31 {dimension_numbers = #tpu.dot_dimension_numbers<[1], [0], [0], [1], [0, 0, 1, 1], [], []>} : vector<2x32xbf16>, vector<32x128xbf16>, vector<2x128xf32> -> vector<2x128xf32>
    %49 = arith.addf %45, %48 : vector<2x128xf32>
    %c0_32 = arith.constant 0 : index
    %c0_33 = arith.constant 0 : index
    %c0_34 = arith.constant 0 : index
    %50 = vector.load %arg1[%c0_32, %c0_33, %c0_34] : memref<2x2x32xf32, #tpu.memory_space<vmem>>, vector<1x2x32xf32>
    %51 = vector.shape_cast %50 : vector<1x2x32xf32> to vector<2x32xf32>
    %52 = arith.truncf %51 : vector<2x32xf32> to vector<2x32xbf16>
    %c0_35 = arith.constant 0 : index
    %c0_36 = arith.constant 0 : index
    %53 = vector.load %arg11[%c0_35, %c0_36] : memref<32x128xbf16, #tpu.memory_space<vmem>>, vector<32x128xbf16>
    %cst_37 = arith.constant dense<0.000000e+00> : vector<2x128xf32>
    %54 = tpu.matmul %52, %53, %cst_37 {dimension_numbers = #tpu.dot_dimension_numbers<[1], [0], [0], [1], [0, 0, 1, 1], [], []>} : vector<2x32xbf16>, vector<32x128xbf16>, vector<2x128xf32> -> vector<2x128xf32>
    %55 = arith.addf %49, %54 : vector<2x128xf32>
    %c0_38 = arith.constant 0 : index
    %c0_39 = arith.constant 0 : index
    %56 = vector.load %arg12[%c0_38, %c0_39] : memref<1x128xf32, #tpu.memory_space<vmem>>, vector<1x128xf32>
    %57 = vector.broadcast %56 : vector<1x128xf32> to vector<2x128xf32>
    %58 = arith.addf %55, %57 : vector<2x128xf32>
    %c0_40 = arith.constant 0 : index
    %c0_41 = arith.constant 0 : index
    %c0_42 = arith.constant 0 : index
    %59 = vector.load %arg2[%c0_40, %c0_41, %c0_42] : memref<2x2x32xf32, #tpu.memory_space<vmem>>, vector<1x2x32xf32>
    %60 = vector.shape_cast %59 : vector<1x2x32xf32> to vector<2x32xf32>
    %61 = vector.extract_strided_slice %58 {offsets = [0, 0], sizes = [2, 32], strides = [1, 1]} : vector<2x128xf32> to vector<2x32xf32>
    %62 = arith.negf %61 : vector<2x32xf32>
    %63 = math.exp %62 : vector<2x32xf32>
    %cst_43 = arith.constant 1.000000e+00 : f32
    %64 = vector.broadcast %cst_43 : f32 to vector<2x32xf32>
    %65 = arith.addf %64, %63 : vector<2x32xf32>
    %66 = arith.divf %64, %65 : vector<2x32xf32>
    %67 = vector.extract_strided_slice %58 {offsets = [0, 32], sizes = [2, 32], strides = [1, 1]} : vector<2x128xf32> to vector<2x32xf32>
    %68 = arith.negf %67 : vector<2x32xf32>
    %69 = math.exp %68 : vector<2x32xf32>
    %cst_44 = arith.constant 1.000000e+00 : f32
    %70 = vector.broadcast %cst_44 : f32 to vector<2x32xf32>
    %71 = arith.addf %70, %69 : vector<2x32xf32>
    %72 = arith.divf %70, %71 : vector<2x32xf32>
    %73 = vector.extract_strided_slice %58 {offsets = [0, 64], sizes = [2, 32], strides = [1, 1]} : vector<2x128xf32> to vector<2x32xf32>
    %74 = math.tanh %73 : vector<2x32xf32>
    %75 = vector.extract_strided_slice %58 {offsets = [0, 96], sizes = [2, 32], strides = [1, 1]} : vector<2x128xf32> to vector<2x32xf32>
    %76 = arith.negf %75 : vector<2x32xf32>
    %77 = math.exp %76 : vector<2x32xf32>
    %cst_45 = arith.constant 1.000000e+00 : f32
    %78 = vector.broadcast %cst_45 : f32 to vector<2x32xf32>
    %79 = arith.addf %78, %77 : vector<2x32xf32>
    %80 = arith.divf %78, %79 : vector<2x32xf32>
    %81 = arith.mulf %72, %60 : vector<2x32xf32>
    %82 = arith.mulf %66, %74 : vector<2x32xf32>
    %83 = arith.addf %81, %82 : vector<2x32xf32>
    %84 = math.tanh %83 : vector<2x32xf32>
    %85 = arith.mulf %80, %84 : vector<2x32xf32>
    %c0_46 = arith.constant 0 : index
    %c0_47 = arith.constant 0 : index
    %c0_48 = arith.constant 0 : index
    %86 = vector.load %arg16[%c0_46, %c0_47, %c0_48] : memref<2x2x32xf32, #tpu.memory_space<vmem>>, vector<1x2x32xf32>
    %87 = vector.shape_cast %86 : vector<1x2x32xf32> to vector<2x32xf32>
    %88 = vector.shape_cast %85 : vector<2x32xf32> to vector<1x2x32xf32>
    tpu.vector_store %arg16[%c0_46, %c0_47, %c0_48], %88 {strides = array<i32>} : memref<2x2x32xf32, #tpu.memory_space<vmem>>, vector<1x2x32xf32>,
    %c0_49 = arith.constant 0 : index
    %c0_50 = arith.constant 0 : index
    %c0_51 = arith.constant 0 : index
    %89 = vector.load %arg17[%c0_49, %c0_50, %c0_51] : memref<2x2x32xf32, #tpu.memory_space<vmem>>, vector<1x2x32xf32>
    %90 = vector.shape_cast %89 : vector<1x2x32xf32> to vector<2x32xf32>
    %91 = vector.shape_cast %83 : vector<2x32xf32> to vector<1x2x32xf32>
    tpu.vector_store %arg17[%c0_49, %c0_50, %c0_51], %91 {strides = array<i32>} : memref<2x2x32xf32, #tpu.memory_space<vmem>>, vector<1x2x32xf32>,
    %92 = arith.truncf %85 : vector<2x32xf32> to vector<2x32xbf16>
    %c0_52 = arith.constant 0 : index
    %c0_53 = arith.constant 0 : index
    %93 = vector.load %arg13[%c0_52, %c0_53] : memref<32x128xbf16, #tpu.memory_space<vmem>>, vector<32x128xbf16>
    %cst_54 = arith.constant dense<0.000000e+00> : vector<2x128xf32>
    %94 = tpu.matmul %92, %93, %cst_54 {dimension_numbers = #tpu.dot_dimension_numbers<[1], [0], [0], [1], [0, 0, 1, 1], [], []>} : vector<2x32xbf16>, vector<32x128xbf16>, vector<2x128xf32> -> vector<2x128xf32>
    %c1_55 = arith.constant 1 : index
    %c0_56 = arith.constant 0 : index
    %c0_57 = arith.constant 0 : index
    %95 = vector.load %arg1[%c1_55, %c0_56, %c0_57] : memref<2x2x32xf32, #tpu.memory_space<vmem>>, vector<1x2x32xf32>
    %96 = vector.shape_cast %95 : vector<1x2x32xf32> to vector<2x32xf32>
    %97 = arith.truncf %96 : vector<2x32xf32> to vector<2x32xbf16>
    %c0_58 = arith.constant 0 : index
    %c0_59 = arith.constant 0 : index
    %98 = vector.load %arg14[%c0_58, %c0_59] : memref<32x128xbf16, #tpu.memory_space<vmem>>, vector<32x128xbf16>
    %cst_60 = arith.constant dense<0.000000e+00> : vector<2x128xf32>
    %99 = tpu.matmul %97, %98, %cst_60 {dimension_numbers = #tpu.dot_dimension_numbers<[1], [0], [0], [1], [0, 0, 1, 1], [], []>} : vector<2x32xbf16>, vector<32x128xbf16>, vector<2x128xf32> -> vector<2x128xf32>
    %100 = arith.addf %94, %99 : vector<2x128xf32>
    %c0_61 = arith.constant 0 : index
    %c0_62 = arith.constant 0 : index
    %101 = vector.load %arg15[%c0_61, %c0_62] : memref<1x128xf32, #tpu.memory_space<vmem>>, vector<1x128xf32>
    %102 = vector.broadcast %101 : vector<1x128xf32> to vector<2x128xf32>
    %103 = arith.addf %100, %102 : vector<2x128xf32>
    %c1_63 = arith.constant 1 : index
    %c0_64 = arith.constant 0 : index
    %c0_65 = arith.constant 0 : index
    %104 = vector.load %arg2[%c1_63, %c0_64, %c0_65] : memref<2x2x32xf32, #tpu.memory_space<vmem>>, vector<1x2x32xf32>
    %105 = vector.shape_cast %104 : vector<1x2x32xf32> to vector<2x32xf32>
    %106 = vector.extract_strided_slice %103 {offsets = [0, 0], sizes = [2, 32], strides = [1, 1]} : vector<2x128xf32> to vector<2x32xf32>
    %107 = arith.negf %106 : vector<2x32xf32>
    %108 = math.exp %107 : vector<2x32xf32>
    %cst_66 = arith.constant 1.000000e+00 : f32
    %109 = vector.broadcast %cst_66 : f32 to vector<2x32xf32>
    %110 = arith.addf %109, %108 : vector<2x32xf32>
    %111 = arith.divf %109, %110 : vector<2x32xf32>
    %112 = vector.extract_strided_slice %103 {offsets = [0, 32], sizes = [2, 32], strides = [1, 1]} : vector<2x128xf32> to vector<2x32xf32>
    %113 = arith.negf %112 : vector<2x32xf32>
    %114 = math.exp %113 : vector<2x32xf32>
    %cst_67 = arith.constant 1.000000e+00 : f32
    %115 = vector.broadcast %cst_67 : f32 to vector<2x32xf32>
    %116 = arith.addf %115, %114 : vector<2x32xf32>
    %117 = arith.divf %115, %116 : vector<2x32xf32>
    %118 = vector.extract_strided_slice %103 {offsets = [0, 64], sizes = [2, 32], strides = [1, 1]} : vector<2x128xf32> to vector<2x32xf32>
    %119 = math.tanh %118 : vector<2x32xf32>
    %120 = vector.extract_strided_slice %103 {offsets = [0, 96], sizes = [2, 32], strides = [1, 1]} : vector<2x128xf32> to vector<2x32xf32>
    %121 = arith.negf %120 : vector<2x32xf32>
    %122 = math.exp %121 : vector<2x32xf32>
    %cst_68 = arith.constant 1.000000e+00 : f32
    %123 = vector.broadcast %cst_68 : f32 to vector<2x32xf32>
    %124 = arith.addf %123, %122 : vector<2x32xf32>
    %125 = arith.divf %123, %124 : vector<2x32xf32>
    %126 = arith.mulf %117, %105 : vector<2x32xf32>
    %127 = arith.mulf %111, %119 : vector<2x32xf32>
    %128 = arith.addf %126, %127 : vector<2x32xf32>
    %129 = math.tanh %128 : vector<2x32xf32>
    %130 = arith.mulf %125, %129 : vector<2x32xf32>
    %c1_69 = arith.constant 1 : index
    %c0_70 = arith.constant 0 : index
    %c0_71 = arith.constant 0 : index
    %131 = vector.load %arg16[%c1_69, %c0_70, %c0_71] : memref<2x2x32xf32, #tpu.memory_space<vmem>>, vector<1x2x32xf32>
    %132 = vector.shape_cast %131 : vector<1x2x32xf32> to vector<2x32xf32>
    %133 = vector.shape_cast %130 : vector<2x32xf32> to vector<1x2x32xf32>
    tpu.vector_store %arg16[%c1_69, %c0_70, %c0_71], %133 {strides = array<i32>} : memref<2x2x32xf32, #tpu.memory_space<vmem>>, vector<1x2x32xf32>,
    %c1_72 = arith.constant 1 : index
    %c0_73 = arith.constant 0 : index
    %c0_74 = arith.constant 0 : index
    %134 = vector.load %arg17[%c1_72, %c0_73, %c0_74] : memref<2x2x32xf32, #tpu.memory_space<vmem>>, vector<1x2x32xf32>
    %135 = vector.shape_cast %134 : vector<1x2x32xf32> to vector<2x32xf32>
    %136 = vector.shape_cast %128 : vector<2x32xf32> to vector<1x2x32xf32>
    tpu.vector_store %arg17[%c1_72, %c0_73, %c0_74], %136 {strides = array<i32>} : memref<2x2x32xf32, #tpu.memory_space<vmem>>, vector<1x2x32xf32>,
    %137 = arith.truncf %130 : vector<2x32xf32> to vector<2x32xbf16>
    %c0_75 = arith.constant 0 : index
    %c0_76 = arith.constant 0 : index
    %138 = vector.load %arg19[%c0_75, %c0_76] : memref<2x32xbf16, #tpu.memory_space<vmem>>, vector<2x32xbf16>
    tpu.vector_store %arg19[%c0_75, %c0_76], %137 {strides = array<i32>} : memref<2x32xbf16, #tpu.memory_space<vmem>>, vector<2x32xbf16>,
    return
  }
}

</mosaic_0001>

<llo_original>
// kernel: tpu_custom_call.1
$region0: #{tpu_custom_call.1}
  #allocation0 [shape = 'u32[]', space=smem, size = 0x4, offset = 0x4, fixed_abs, tag = 'smem constant byte address 0x4 - core index']
  #allocation1 [shape = 'u32[144,128]{1,0:T(1,128)}', space=vmem, size = 0x12000, scoped, tag = 'internal scratch']
  %s0 = inlined_call_operand.hbm [shape: bf16[2,16], index: 0, kind: input, shape index: {}]
  %s1 = inlined_call_operand.hbm [shape: f32[2,2,32], index: 1, kind: input, shape index: {}]
  %s2 = inlined_call_operand.hbm [shape: f32[2,2,32], index: 2, kind: input, shape index: {}]
  %s3 = inlined_call_operand.hbm [shape: bf16[2,8,32], index: 3, kind: input, shape index: {}]
  %s4 = inlined_call_operand.hbm [shape: bf16[2,8,32], index: 4, kind: input, shape index: {}]
  %s5 = inlined_call_operand.hbm [shape: f32[2,8], index: 5, kind: input, shape index: {}]
  %s6 = inlined_call_operand.vmem [shape: bf16[32,32], index: 6, kind: input, shape index: {}]
  %s7 = inlined_call_operand.vmem [shape: f32[1,32], index: 7, kind: input, shape index: {}]
  %s8 = inlined_call_operand.hbm [shape: f32[1,32], index: 8, kind: input, shape index: {}]
  %s9 = inlined_call_operand.hbm [shape: bf16[16,128], index: 9, kind: input, shape index: {}]
  %s10 = inlined_call_operand.vmem [shape: bf16[32,128], index: 10, kind: input, shape index: {}]
  %s11 = inlined_call_operand.hbm [shape: bf16[32,128], index: 11, kind: input, shape index: {}]
  %s12 = inlined_call_operand.hbm [shape: f32[1,128], index: 12, kind: input, shape index: {}]
  %s13 = inlined_call_operand.vmem [shape: bf16[32,128], index: 13, kind: input, shape index: {}]
  %s14 = inlined_call_operand.hbm [shape: bf16[32,128], index: 14, kind: input, shape index: {}]
  %s15 = inlined_call_operand.vmem [shape: f32[1,128], index: 15, kind: input, shape index: {}]
  %s16 = inlined_call_operand.hbm [shape: f32[2,2,32], index: 16, kind: output, shape index: {0}]
  %s17 = inlined_call_operand.hbm [shape: f32[2,2,32], index: 17, kind: output, shape index: {1}]
  %s18 = inlined_call_operand.hbm [shape: f32[2,8], index: 18, kind: output, shape index: {2}]
  %s19 = inlined_call_operand.hbm [shape: bf16[2,32], index: 19, kind: output, shape index: {3}]
  %20 = xla_tuple %s16, %s17, %s18, %s19
  %s21 = sld [smem:[#allocation0]]
  $region142: #{tpu_custom_call.1} parent=0
    _
  %s23 = ssub.s32 1, %s21
  %s24 = scalar_select 0, %s23, %s21
  $region1: #{tpu_custom_call.1} parent=0
    #allocation2 [shape = 'u8[512]{0}', space=vmem, size = 0x400, scoped, tag = 'input window, operand 0, single buffered']
    #allocation3 [shape = 's32[1]{0}', space=sflag, size = 0x4, scoped, tag = 'scoped memory for tpu_custom_call.1']
    #allocation4 [shape = 's32[1]{0}', space=sflag, size = 0x4, scoped, tag = 'scoped memory for tpu_custom_call.1']
    #allocation5 [shape = 'u8[2048]{0}', space=vmem, size = 0x800, scoped, tag = 'input window, operand 1, single buffered']
    #allocation6 [shape = 's32[1]{0}', space=sflag, size = 0x4, scoped, tag = 'scoped memory for tpu_custom_call.1']
    #allocation7 [shape = 'u8[2048]{0}', space=vmem, size = 0x800, scoped, tag = 'input window, operand 2, single buffered']
    #allocation8 [shape = 'u8[4096]{0}', space=vmem, size = 0x1000, scoped, tag = 'input window, operand 3, single buffered']
    #allocation9 [shape = 's32[1]{0}', space=sflag, size = 0x4, scoped, tag = 'scoped memory for tpu_custom_call.1']
    #allocation10 [shape = 'u8[4096]{0}', space=vmem, size = 0x1000, scoped, tag = 'input window, operand 4, single buffered']
    #allocation11 [shape = 'u8[1024]{0}', space=vmem, size = 0x400, scoped, tag = 'input window, operand 5, single buffered']
    #allocation12 [shape = 's32[1]{0}', space=sflag, size = 0x4, scoped, tag = 'scoped memory for tpu_custom_call.1']
    #allocation13 [shape = 'u8[512]{0}', space=vmem, size = 0x400, scoped, tag = 'input window, operand 8, single buffered']
    #allocation14 [shape = 'u8[4096]{0}', space=vmem, size = 0x1000, scoped, tag = 'input window, operand 9, single buffered']
    #allocation15 [shape = 's32[1]{0}', space=sflag, size = 0x4, scoped, tag = 'scoped memory for tpu_custom_call.1']
    #allocation16 [shape = 'u8[8192]{0}', space=vmem, size = 0x2000, scoped, tag = 'input window, operand 11, single buffered']
    #allocation17 [shape = 'u8[512]{0}', space=vmem, size = 0x400, scoped, tag = 'input window, operand 12, single buffered']
    #allocation18 [shape = 's32[1]{0}', space=sflag, size = 0x4, scoped, tag = 'scoped memory for tpu_custom_call.1']
    #allocation19 [shape = 'u8[8192]{0}', space=vmem, size = 0x2000, scoped, tag = 'input window, operand 14, single buffered']
    #allocation20 [shape = 'u8[2048]{0}', space=vmem, size = 0x800, scoped, tag = 'output window, operand 0, single buffered']
    #allocation21 [shape = 'u8[2048]{0}', space=vmem, size = 0x800, scoped, tag = 'output window, operand 1, single buffered']
    #allocation22 [shape = 's32[1]{0}', space=sflag, size = 0x4, scoped, tag = 'scoped memory for tpu_custom_call.1']
    #allocation23 [shape = 'u8[1024]{0}', space=vmem, size = 0x400, scoped, tag = 'output window, operand 2, single buffered']
    #allocation24 [shape = 'u8[512]{0}', space=vmem, size = 0x400, scoped, tag = 'output window, operand 3, single buffered']
    #allocation25 [shape = 's32[1]{0}', space=sflag, size = 0x4, scoped, tag = 'scoped memory for tpu_custom_call.1']
    %25 = vsyncpa [#allocation3], 0
    %26 = vsyncpa [#allocation6], 0
    %27 = vsyncpa [#allocation9], 0
    %28 = vsyncpa [#allocation12], 0
    %29 = vsyncpa [#allocation15], 0
    %30 = vsyncpa [#allocation18], 0
    %31 = vsyncpa [#allocation4], 0
    %32 = vsyncpa [#allocation22], 0
    %33 = vsyncpa [#allocation25], 0
    // Predicated region
    $region2: #{tpu_custom_call.1} parent=1 // pred_check
      _
    $region3: #{tpu_custom_call.1} parent=1 // pred_check_branch
      %35 = sbr.rel (0) target = $region5
    $region4: #{tpu_custom_call.1} parent=1 // pred_region
      %s37 = ssub.s32 16, 16
      %38 = vsyncadd [#allocation3], %s37
      %s40 = sshll.u32 [#allocation2], 4
      %s41 = int_to_ptr.vmem [resolvable:$true] %s40
      %43 = dma.hbm_to_vmem [thread:$0]  %s0, 16, %s41, [#allocation3]
    $region5: #{tpu_custom_call.1} parent=1 // pred_fallthru
      _
    // Predicated region
    $region6: #{tpu_custom_call.1} parent=1 // pred_check
      _
    $region7: #{tpu_custom_call.1} parent=1 // pred_check_branch
      %45 = sbr.rel (0) target = $region9
    $region8: #{tpu_custom_call.1} parent=1 // pred_region
      %s47 = ssub.s32 64, 64
      %48 = vsyncadd [#allocation6], %s47
      %s49 = sshll.u32 [#allocation5], 4
      %s50 = int_to_ptr.vmem [resolvable:$true] %s49
      %55 = dma.hbm_to_vmem [thread:$0]  %s1, 64, %s50, [#allocation6], 32, 32, 2
    $region9: #{tpu_custom_call.1} parent=1 // pred_fallthru
      _
    // Predicated region
    $region10: #{tpu_custom_call.1} parent=1 // pred_check
      _
    $region11: #{tpu_custom_call.1} parent=1 // pred_check_branch
      %57 = sbr.rel (0) target = $region13
    $region12: #{tpu_custom_call.1} parent=1 // pred_region
      %s59 = ssub.s32 64, 64
      %60 = vsyncadd [#allocation6], %s59
      %s61 = sshll.u32 [#allocation7], 4
      %s62 = int_to_ptr.vmem [resolvable:$true] %s61
      %67 = dma.hbm_to_vmem [thread:$0]  %s2, 64, %s62, [#allocation6], 32, 32, 2
    $region13: #{tpu_custom_call.1} parent=1 // pred_fallthru
      _
    // Predicated region
    $region14: #{tpu_custom_call.1} parent=1 // pred_check
      _
    $region15: #{tpu_custom_call.1} parent=1 // pred_check_branch
      %69 = sbr.rel (0) target = $region17
    $region16: #{tpu_custom_call.1} parent=1 // pred_region
      %s71 = ssub.s32 128, 128
      %72 = vsyncadd [#allocation9], %s71
      %s73 = sshll.u32 [#allocation8], 4
      %s74 = int_to_ptr.vmem [resolvable:$true] %s73
      %79 = dma.hbm_to_vmem [thread:$0]  %s3, 128, %s74, [#allocation9], 64, 64, 4
    $region17: #{tpu_custom_call.1} parent=1 // pred_fallthru
      _
    // Predicated region
    $region18: #{tpu_custom_call.1} parent=1 // pred_check
      _
    $region19: #{tpu_custom_call.1} parent=1 // pred_check_branch
      %81 = sbr.rel (0) target = $region21
    $region20: #{tpu_custom_call.1} parent=1 // pred_region
      %s83 = ssub.s32 128, 128
      %84 = vsyncadd [#allocation9], %s83
      %s85 = sshll.u32 [#allocation10], 4
      %s86 = int_to_ptr.vmem [resolvable:$true] %s85
      %91 = dma.hbm_to_vmem [thread:$0]  %s4, 128, %s86, [#allocation9], 64, 64, 4
    $region21: #{tpu_custom_call.1} parent=1 // pred_fallthru
      _
    // Predicated region
    $region22: #{tpu_custom_call.1} parent=1 // pred_check
      _
    $region23: #{tpu_custom_call.1} parent=1 // pred_check_branch
      %93 = sbr.rel (0) target = $region25
    $region24: #{tpu_custom_call.1} parent=1 // pred_region
      %s95 = ssub.s32 32, 32
      %96 = vsyncadd [#allocation12], %s95
      %s98 = sshll.u32 [#allocation11], 4
      %s99 = int_to_ptr.vmem [resolvable:$true] %s98
      %101 = dma.hbm_to_vmem [thread:$0]  %s5, 32, %s99, [#allocation12]
    $region25: #{tpu_custom_call.1} parent=1 // pred_fallthru
      _
    // Predicated region
    $region26: #{tpu_custom_call.1} parent=1 // pred_check
      _
    $region27: #{tpu_custom_call.1} parent=1 // pred_check_branch
      %103 = sbr.rel (0) target = $region29
    $region28: #{tpu_custom_call.1} parent=1 // pred_region
      _
    $region29: #{tpu_custom_call.1} parent=1 // pred_fallthru
      _
    // Predicated region
    $region30: #{tpu_custom_call.1} parent=1 // pred_check
      _
    $region31: #{tpu_custom_call.1} parent=1 // pred_check_branch
      %105 = sbr.rel (0) target = $region33
    $region32: #{tpu_custom_call.1} parent=1 // pred_region
      _
    $region33: #{tpu_custom_call.1} parent=1 // pred_fallthru
      _
    // Predicated region
    $region34: #{tpu_custom_call.1} parent=1 // pred_check
      _
    $region35: #{tpu_custom_call.1} parent=1 // pred_check_branch
      %107 = sbr.rel (0) target = $region37
    $region36: #{tpu_custom_call.1} parent=1 // pred_region
      %s109 = ssub.s32 16, 16
      %110 = vsyncadd [#allocation12], %s109
      %s112 = sshll.u32 [#allocation13], 4
      %s113 = int_to_ptr.vmem [resolvable:$true] %s112
      %115 = dma.hbm_to_vmem [thread:$0]  %s8, 16, %s113, [#allocation12]
    $region37: #{tpu_custom_call.1} parent=1 // pred_fallthru
      _
    // Predicated region
    $region38: #{tpu_custom_call.1} parent=1 // pred_check
      _
    $region39: #{tpu_custom_call.1} parent=1 // pred_check_branch
      %117 = sbr.rel (0) target = $region41
    $region40: #{tpu_custom_call.1} parent=1 // pred_region
      %s119 = ssub.s32 128, 128
      %120 = vsyncadd [#allocation15], %s119
      %s121 = sshll.u32 [#allocation14], 4
      %s122 = int_to_ptr.vmem [resolvable:$true] %s121
      %127 = dma.hbm_to_vmem [thread:$0]  %s9, 128, %s122, [#allocation15], 64, 64, 4
    $region41: #{tpu_custom_call.1} parent=1 // pred_fallthru
      _
    // Predicated region
    $region42: #{tpu_custom_call.1} parent=1 // pred_check
      _
    $region43: #{tpu_custom_call.1} parent=1 // pred_check_branch
      %129 = sbr.rel (0) target = $region45
    $region44: #{tpu_custom_call.1} parent=1 // pred_region
      _
    $region45: #{tpu_custom_call.1} parent=1 // pred_fallthru
      _
    // Predicated region
    $region46: #{tpu_custom_call.1} parent=1 // pred_check
      _
    $region47: #{tpu_custom_call.1} parent=1 // pred_check_branch
      %131 = sbr.rel (0) target = $region49
    $region48: #{tpu_custom_call.1} parent=1 // pred_region
      %s133 = ssub.s32 256, 256
      %134 = vsyncadd [#allocation15], %s133
      %s135 = sshll.u32 [#allocation16], 4
      %s136 = int_to_ptr.vmem [resolvable:$true] %s135
      %141 = dma.hbm_to_vmem [thread:$0]  %s11, 256, %s136, [#allocation15], 64, 64, 4
    $region49: #{tpu_custom_call.1} parent=1 // pred_fallthru
      _
    // Predicated region
    $region50: #{tpu_custom_call.1} parent=1 // pred_check
      _
    $region51: #{tpu_custom_call.1} parent=1 // pred_check_branch
      %143 = sbr.rel (0) target = $region53
    $region52: #{tpu_custom_call.1} parent=1 // pred_region
      %s145 = ssub.s32 16, 16
      %146 = vsyncadd [#allocation18], %s145
      %s148 = sshll.u32 [#allocation17], 4
      %s149 = int_to_ptr.vmem [resolvable:$true] %s148
      %151 = dma.hbm_to_vmem [thread:$0]  %s12, 16, %s149, [#allocation18]
    $region53: #{tpu_custom_call.1} parent=1 // pred_fallthru
      _
    // Predicated region
    $region54: #{tpu_custom_call.1} parent=1 // pred_check
      _
    $region55: #{tpu_custom_call.1} parent=1 // pred_check_branch
      %153 = sbr.rel (0) target = $region57
    $region56: #{tpu_custom_call.1} parent=1 // pred_region
      _
    $region57: #{tpu_custom_call.1} parent=1 // pred_fallthru
      _
    // Predicated region
    $region58: #{tpu_custom_call.1} parent=1 // pred_check
      _
    $region59: #{tpu_custom_call.1} parent=1 // pred_check_branch
      %155 = sbr.rel (0) target = $region61
    $region60: #{tpu_custom_call.1} parent=1 // pred_region
      %s157 = ssub.s32 256, 256
      %158 = vsyncadd [#allocation18], %s157
      %s159 = sshll.u32 [#allocation19], 4
      %s160 = int_to_ptr.vmem [resolvable:$true] %s159
      %165 = dma.hbm_to_vmem [thread:$0]  %s14, 256, %s160, [#allocation18], 64, 64, 4
    $region61: #{tpu_custom_call.1} parent=1 // pred_fallthru
      _
    // Predicated region
    $region62: #{tpu_custom_call.1} parent=1 // pred_check
      _
    $region63: #{tpu_custom_call.1} parent=1 // pred_check_branch
      %167 = sbr.rel (0) target = $region65
    $region64: #{tpu_custom_call.1} parent=1 // pred_region
      _
    $region65: #{tpu_custom_call.1} parent=1 // pred_fallthru
      _
    // Predicated region
    $region66: #{tpu_custom_call.1} parent=1 // pred_check
      _
    $region67: #{tpu_custom_call.1} parent=1 // pred_check_branch
      %169 = sbr.rel (0) target = $region69
    $region68: #{tpu_custom_call.1} parent=1 // pred_region
      %170 = dma.done [#allocation3], 16
    $region69: #{tpu_custom_call.1} parent=1 // pred_fallthru
      _
    // Predicated region
    $region70: #{tpu_custom_call.1} parent=1 // pred_check
      _
    $region71: #{tpu_custom_call.1} parent=1 // pred_check_branch
      %172 = sbr.rel (0) target = $region73
    $region72: #{tpu_custom_call.1} parent=1 // pred_region
      %173 = dma.done [#allocation6], 64
    $region73: #{tpu_custom_call.1} parent=1 // pred_fallthru
      _
    // Predicated region
    $region74: #{tpu_custom_call.1} parent=1 // pred_check
      _
    $region75: #{tpu_custom_call.1} parent=1 // pred_check_branch
      %175 = sbr.rel (0) target = $region77
    $region76: #{tpu_custom_call.1} parent=1 // pred_region
      %176 = dma.done [#allocation6], 64
    $region77: #{tpu_custom_call.1} parent=1 // pred_fallthru
      _
    // Predicated region
    $region78: #{tpu_custom_call.1} parent=1 // pred_check
      _
    $region79: #{tpu_custom_call.1} parent=1 // pred_check_branch
      %178 = sbr.rel (0) target = $region81
    $region80: #{tpu_custom_call.1} parent=1 // pred_region
      %179 = dma.done [#allocation9], 128
    $region81: #{tpu_custom_call.1} parent=1 // pred_fallthru
      _
    // Predicated region
    $region82: #{tpu_custom_call.1} parent=1 // pred_check
      _
    $region83: #{tpu_custom_call.1} parent=1 // pred_check_branch
      %181 = sbr.rel (0) target = $region85
    $region84: #{tpu_custom_call.1} parent=1 // pred_region
      %182 = dma.done [#allocation9], 128
    $region85: #{tpu_custom_call.1} parent=1 // pred_fallthru
      _
    // Predicated region
    $region86: #{tpu_custom_call.1} parent=1 // pred_check
      _
    $region87: #{tpu_custom_call.1} parent=1 // pred_check_branch
      %184 = sbr.rel (0) target = $region89
    $region88: #{tpu_custom_call.1} parent=1 // pred_region
      %185 = dma.done [#allocation12], 32
    $region89: #{tpu_custom_call.1} parent=1 // pred_fallthru
      _
    // Predicated region
    $region90: #{tpu_custom_call.1} parent=1 // pred_check
      _
    $region91: #{tpu_custom_call.1} parent=1 // pred_check_branch
      %187 = sbr.rel (0) target = $region93
    $region92: #{tpu_custom_call.1} parent=1 // pred_region
      %188 = dma.done [#allocation12], 16
    $region93: #{tpu_custom_call.1} parent=1 // pred_fallthru
      _
    // Predicated region
    $region94: #{tpu_custom_call.1} parent=1 // pred_check
      _
    $region95: #{tpu_custom_call.1} parent=1 // pred_check_branch
      %190 = sbr.rel (0) target = $region97
    $region96: #{tpu_custom_call.1} parent=1 // pred_region
      %191 = dma.done [#allocation15], 128
    $region97: #{tpu_custom_call.1} parent=1 // pred_fallthru
      _
    // Predicated region
    $region98: #{tpu_custom_call.1} parent=1 // pred_check
      _
    $region99: #{tpu_custom_call.1} parent=1 // pred_check_branch
      %193 = sbr.rel (0) target = $region101
    $region100: #{tpu_custom_call.1} parent=1 // pred_region
      %194 = dma.done [#allocation15], 256
    $region101: #{tpu_custom_call.1} parent=1 // pred_fallthru
      _
    // Predicated region
    $region102: #{tpu_custom_call.1} parent=1 // pred_check
      _
    $region103: #{tpu_custom_call.1} parent=1 // pred_check_branch
      %196 = sbr.rel (0) target = $region105
    $region104: #{tpu_custom_call.1} parent=1 // pred_region
      %197 = dma.done [#allocation18], 16
    $region105: #{tpu_custom_call.1} parent=1 // pred_fallthru
      _
    // Predicated region
    $region106: #{tpu_custom_call.1} parent=1 // pred_check
      _
    $region107: #{tpu_custom_call.1} parent=1 // pred_check_branch
      %199 = sbr.rel (0) target = $region109
    $region108: #{tpu_custom_call.1} parent=1 // pred_region
      %200 = dma.done [#allocation18], 256
    $region109: #{tpu_custom_call.1} parent=1 // pred_fallthru
      _
    %s202 = scalar_lea.vmem [#allocation5], 2
    %v203 = vld [vmem:[%s202] sm:$0x3]
    %v204 = vpack.c.bf16 %v203, %v203
    %v205 = vld [vmem:[%s6] sm:$0xf]
    %v206 = vld [vmem:[%s6 + $0x4] sm:$0xf]
    %v207 = vld [vmem:[%s6 + $0x8] sm:$0xf]
    %v208 = vld [vmem:[%s6 + $0xc] sm:$0xf]
    %v209 = vld [vmem:[%s7] sm:$0x1]
    %v211 = vlaneseq
    %v212 = vshrl.u32 %v211, 7
    %v213 = vsub.s32 0, %v212
    %v214 = vrot.slane %v209, %v213
    %v220 = vunpack.c.l.b16 %v205
    %v221 = vunpack.c.l.b16 %v206
    %v222 = vunpack.c.l.b16 %v207
    %v223 = vunpack.c.l.b16 %v208
    %v224 = vpack.c.b16 %v221, %v220
    %v225 = vpack.c.b16 %v223, %v222
    %vm228 = vcmask 261120
    %v230 = vsel %vm228, %v204, 0
    %232 = vmatprep.subr.bf16.mxu0 0
    %233 = vmatpush1.bf16.msra.mxu0 %v224
    %234 = vmatprep.subr.bf16.mxu0 0
    %235 = vmatpush1.bf16.msra.mxu0 %v225
    %236 = vmatprep.subr.bf16.mxu0 0
    %237 = vmatpush1.bf16.msra.mxu0 0
    %238 = vmatprep.subr.bf16.mxu0 0
    %239 = vmatpush1.bf16.msra.mxu0 0
    %240 = vmatprep.subr.bf16.mxu0 0
    %241 = vmatpush1.bf16.msra.mxu0 0
    %242 = vmatprep.subr.bf16.mxu0 0
    %243 = vmatpush1.bf16.msra.mxu0 0
    %244 = vmatprep.subr.bf16.mxu0 0
    %245 = vmatpush1.bf16.msra.mxu0 0
    %246 = vmatprep.subr.bf16.mxu0 0
    %247 = vmatpush1.bf16.msra.mxu0 0
    %248 = vmatprep.subr.bf16.mxu0 0
    %249 = vmatpush1.bf16.msra.mxu0 0
    %250 = vmatprep.subr.bf16.mxu0 0
    %251 = vmatpush1.bf16.msra.mxu0 0
    %252 = vmatprep.subr.bf16.mxu0 0
    %253 = vmatpush1.bf16.msra.mxu0 0
    %254 = vmatprep.subr.bf16.mxu0 0
    %255 = vmatpush1.bf16.msra.mxu0 0
    %256 = vmatprep.subr.bf16.mxu0 0
    %257 = vmatpush1.bf16.msra.mxu0 0
    %258 = vmatprep.subr.bf16.mxu0 0
    %259 = vmatpush1.bf16.msra.mxu0 0
    %260 = vmatprep.subr.bf16.mxu0 0
    %261 = vmatpush1.bf16.msra.mxu0 0
    %262 = vmatprep.subr.bf16.mxu0 0
    %263 = vmatpush1.bf16.msra.mxu0 0
    %264 = vmatprep.mubr.bf16.mxu0 0
    %265 = vmatmul.mubr.bf16.gmra.mrb[0].mxu0 %v230
    %v266 = vpop.f32.mrb[0].mxu0
    %v267 = vadd.f32 %v214, %v266
    %v268 = vpop.f32.mrb[0].mxu0
    %v269 = vpop.f32.mrb[0].mxu0
    %v270 = vpop.f32.mrb[0].mxu0
    %271 = vdwg.mxu0
    %v272 = vld [vmem:[#allocation10] sm:$0xf]
    %v273 = vld [vmem:[#allocation10 + $0x4] sm:$0xf]
    %v274 = vunpack.c.l.bf16 %v272
    %v275 = vunpack.c.l.bf16 %v273
    %v278 = vunpack.c.l.s4 1966171168
    %v279 = vunpack.c.0.s8 %v278
    %v280 = vlaneseq
    %v281 = vshrl.u32 %v280, 7
    %v282 = vsub.s32 %v279, %v281
    %v283 = vrot.slane %v267, %v282
    %v284 = vcombine.high %v283, %v283
    %v286 = vunpack.c.l.s4 1966171168
    %v287 = vunpack.c.0.s8 %v286
    %v288 = vlaneseq
    %v289 = vshrl.u32 %v288, 7
    %v290 = vsub.s32 %v287, %v289
    %v291 = vrot.slane %v283, %v290
    %v293 = vunpack.c.l.s4 1966171168
    %v294 = vunpack.c.0.s8 %v293
    %v295 = vlaneseq
    %v296 = vshrl.u32 %v295, 7
    %v297 = vsub.s32 %v294, %v296
    %v298 = vrot.slane %v284, %v297
    %v299 = vlaneseq
    %v300 = vshrl.u32 %v299, 7
    %v301 = vsub.s32 0, %v300
    %v302 = vrot.slane %v291, %v301
    %v303 = vlaneseq
    %v304 = vshrl.u32 %v303, 7
    %v305 = vsub.s32 0, %v304
    %v306 = vrot.slane %v298, %v305
    %v309 = vadd.f32 %v274, %v302
    %v310 = vadd.f32 %v275, %v306
    %v311 = vtanh.pop %v309
    %v312 = vtanh.pop %v310
    %v313 = vld [vmem:[#allocation13] sm:$0x1]
    %v315 = vlaneseq
    %v316 = vshrl.u32 %v315, 7
    %v317 = vsub.s32 0, %v316
    %v318 = vrot.slane %v313, %v317
    %v320 = vmul.f32 %v311, %v318
    %v321 = vmul.f32 %v312, %v318
    %v322 = vsel %vm228, %v320, 0.0
    %323 = vadd.xlane.f32.xlu0 %v322
    %v324 = vpop.xlane.xlu0 %323
    %v325 = vsel %vm228, %v321, 0.0
    %326 = vadd.xlane.f32.xlu0 %v325
    %v327 = vpop.xlane.xlu0 %326
    %v328 = vld [vmem:[#allocation11] sm:$0x3]
    %vm329 = vcmp.gt.f32.partialorder %v328, 0.0
    %v332 = vlaneseq
    %v333 = vand.u32 %v332, 127
    %v334 = vlaneseq
    %v335 = vshrl.u32 %v334, 7
    %v336 = vsub.s32 %v333, %v335
    %v337 = vrot.slane %v324, %v336
    %v338 = vlaneseq
    %v339 = vshrl.u32 %v338, 7
    %v340 = vsub.s32 %v333, %v339
    %v341 = vrot.slane %v327, %v340
    %vm342 = vcmask 1041409
    %v343 = vsel %vm342, %v341, %v337
    %v345 = vsel %vm329, %v343, -1e+30
    %vm346 = vcmask 58368
    %v347 = vsel %vm346, %v345, -inf
    %348 = vmax.xlane.f32.xlu0 %v347
    %v349 = vpop.xlane.xlu0 %348
    %v350 = vsub.f32 %v345, %v349
    %v351 = vmul.f32 %v350, 1.442695
    %v352 = vpow.pop %v351
    %v353 = vmul.f32 %v352, %v328
    %v354 = vsel %vm346, %v353, 0.0
    %355 = vadd.xlane.f32.xlu0 %v354
    %v356 = vpop.xlane.xlu0 %355
    %v357 = vmax.f32 %v356, 1e-20
    %v358 = vrcp.pop %v357
    %v359 = vmul.f32 %v353, %v358
    %360 = vst.msk [vmem:[#allocation23] sm:$0x3] %vm346, %v359
    %v361 = vlaneseq
    %v362 = vshrl.u32 %v361, 7
    %v363 = vsub.s32 0, %v362
    %v364 = vrot.slane %v359, %v363
    %366 = vbcast.lane.b32.xlu0 %v364, 256
    %v367 = vpop.permute.xlu0 %366
    %v368 = vlaneseq
    %v369 = vshrl.u32 %v368, 7
    %v370 = vsub.s32 1, %v369
    %v371 = vrot.slane %v359, %v370
    %373 = vbcast.lane.b32.xlu0 %v371, 256
    %v374 = vpop.permute.xlu0 %373
    %v375 = vld [vmem:[#allocation8] sm:$0xf]
    %v376 = vld [vmem:[#allocation8 + $0x4] sm:$0xf]
    %v377 = vunpack.c.l.bf16 %v375
    %v378 = vunpack.c.l.bf16 %v376
    %v379 = vmul.f32 %v367, %v377
    %v380 = vmul.f32 %v374, %v378
    %v381 = vsel %vm228, %v379, 0.0
    %v382 = vrot.slane %v381, 4
    %v383 = vadd.f32 %v381, %v382
    %v384 = vrot.slane %v383, 2
    %v385 = vadd.f32 %v383, %v384
    %v386 = vrot.slane %v385, 1
    %v387 = vadd.f32 %v385, %v386
    %v388 = vsel %vm228, %v380, 0.0
    %v389 = vrot.slane %v388, 4
    %v390 = vadd.f32 %v388, %v389
    %v391 = vrot.slane %v390, 2
    %v392 = vadd.f32 %v390, %v391
    %v393 = vrot.slane %v392, 1
    %v394 = vadd.f32 %v392, %v393
    %v395 = vld [vmem:[#allocation2] sm:$0x1]
    %v396 = vld [vmem:[#allocation14] sm:$0xf]
    %v397 = vld [vmem:[#allocation14 + $0x4] sm:$0xf]
    %v398 = vpack.c.bf16 %v387, %v387
    %v399 = vpack.c.bf16 %v394, %v394
    %v400 = vld [vmem:[%s10] sm:$0xf]
    %v401 = vld [vmem:[%s10 + $0x4] sm:$0xf]
    %v402 = vld [vmem:[%s10 + $0x8] sm:$0xf]
    %v403 = vld [vmem:[%s10 + $0xc] sm:$0xf]
    %v406 = vunpack.c.l.b16 %v398
    %v407 = vunpack.c.l.b16 %v399
    %v408 = vsel %vm342, %v407, %v406
    %v409 = vpack.c.b16 %v408, %v408
    %v414 = vunpack.c.l.b16 %v400
    %v415 = vunpack.c.l.b16 %v401
    %v416 = vunpack.c.l.b16 %v402
    %v417 = vunpack.c.l.b16 %v403
    %v418 = vpack.c.b16 %v415, %v414
    %v419 = vpack.c.b16 %v417, %v416
    %v423 = vsel %vm228, %v409, 0
    %425 = vmatprep.subr.bf16.mxu0 0
    %426 = vmatpush1.bf16.msra.mxu0 %v418
    %427 = vmatprep.subr.bf16.mxu0 0
    %428 = vmatpush1.bf16.msra.mxu0 %v419
    %429 = vmatprep.subr.bf16.mxu0 0
    %430 = vmatpush1.bf16.msra.mxu0 0
    %431 = vmatprep.subr.bf16.mxu0 0
    %432 = vmatpush1.bf16.msra.mxu0 0
    %433 = vmatprep.subr.bf16.mxu0 0
    %434 = vmatpush1.bf16.msra.mxu0 0
    %435 = vmatprep.subr.bf16.mxu0 0
    %436 = vmatpush1.bf16.msra.mxu0 0
    %437 = vmatprep.subr.bf16.mxu0 0
    %438 = vmatpush1.bf16.msra.mxu0 0
    %439 = vmatprep.subr.bf16.mxu0 0
    %440 = vmatpush1.bf16.msra.mxu0 0
    %441 = vmatprep.subr.bf16.mxu0 0
    %442 = vmatpush1.bf16.msra.mxu0 0
    %443 = vmatprep.subr.bf16.mxu0 0
    %444 = vmatpush1.bf16.msra.mxu0 0
    %445 = vmatprep.subr.bf16.mxu0 0
    %446 = vmatpush1.bf16.msra.mxu0 0
    %447 = vmatprep.subr.bf16.mxu0 0
    %448 = vmatpush1.bf16.msra.mxu0 0
    %449 = vmatprep.subr.bf16.mxu0 0
    %450 = vmatpush1.bf16.msra.mxu0 0
    %451 = vmatprep.subr.bf16.mxu0 0
    %452 = vmatpush1.bf16.msra.mxu0 0
    %453 = vmatprep.subr.bf16.mxu0 0
    %454 = vmatpush1.bf16.msra.mxu0 0
    %455 = vmatprep.subr.bf16.mxu0 0
    %456 = vmatpush1.bf16.msra.mxu0 0
    %457 = vmatprep.mubr.bf16.mxu0 0
    %458 = vmatmul.mubr.bf16.gmra.mrb[0].mxu0 %v423
    %v459 = vpop.f32.mrb[0].mxu0
    %v460 = vadd.f32 0.0, %v459
    %v461 = vpop.f32.mrb[0].mxu0
    %v462 = vpop.f32.mrb[0].mxu0
    %v463 = vpop.f32.mrb[0].mxu0
    %464 = vdwg.mxu0
    %v467 = vunpack.c.l.b16 %v396
    %v468 = vunpack.c.l.b16 %v397
    %v469 = vpack.c.b16 %v468, %v467
    %vm471 = vcmask 130048
    %v473 = vsel %vm471, %v395, 0
    %475 = vmatprep.subr.bf16.mxu0 0
    %476 = vmatpush1.bf16.msra.mxu0 %v469
    %477 = vmatprep.subr.bf16.mxu0 0
    %478 = vmatpush1.bf16.msra.mxu0 0
    %479 = vmatprep.subr.bf16.mxu0 0
    %480 = vmatpush1.bf16.msra.mxu0 0
    %481 = vmatprep.subr.bf16.mxu0 0
    %482 = vmatpush1.bf16.msra.mxu0 0
    %483 = vmatprep.subr.bf16.mxu0 0
    %484 = vmatpush1.bf16.msra.mxu0 0
    %485 = vmatprep.subr.bf16.mxu0 0
    %486 = vmatpush1.bf16.msra.mxu0 0
    %487 = vmatprep.subr.bf16.mxu0 0
    %488 = vmatpush1.bf16.msra.mxu0 0
    %489 = vmatprep.subr.bf16.mxu0 0
    %490 = vmatpush1.bf16.msra.mxu0 0
    %491 = vmatprep.subr.bf16.mxu0 0
    %492 = vmatpush1.bf16.msra.mxu0 0
    %493 = vmatprep.subr.bf16.mxu0 0
    %494 = vmatpush1.bf16.msra.mxu0 0
    %495 = vmatprep.subr.bf16.mxu0 0
    %496 = vmatpush1.bf16.msra.mxu0 0
    %497 = vmatprep.subr.bf16.mxu0 0
    %498 = vmatpush1.bf16.msra.mxu0 0
    %499 = vmatprep.subr.bf16.mxu0 0
    %500 = vmatpush1.bf16.msra.mxu0 0
    %501 = vmatprep.subr.bf16.mxu0 0
    %502 = vmatpush1.bf16.msra.mxu0 0
    %503 = vmatprep.subr.bf16.mxu0 0
    %504 = vmatpush1.bf16.msra.mxu0 0
    %505 = vmatprep.subr.bf16.mxu0 0
    %506 = vmatpush1.bf16.msra.mxu0 0
    %507 = vmatprep.mubr.bf16.mxu0 0
    %508 = vmatmul.mubr.bf16.gmra.mrb[0].mxu0 %v473
    %v509 = vpop.f32.mrb[0].mxu0
    %v510 = vadd.f32 %v460, %v509
    %v511 = vpop.f32.mrb[0].mxu0
    %v512 = vpop.f32.mrb[0].mxu0
    %v513 = vpop.f32.mrb[0].mxu0
    %514 = vdwg.mxu0
    %v515 = vld [vmem:[#allocation5] sm:$0x3]
    %v516 = vpack.c.bf16 %v515, %v515
    %v517 = vld [vmem:[#allocation16] sm:$0xf]
    %v518 = vld [vmem:[#allocation16 + $0x4] sm:$0xf]
    %v519 = vld [vmem:[#allocation16 + $0x8] sm:$0xf]
    %v520 = vld [vmem:[#allocation16 + $0xc] sm:$0xf]
    %v525 = vunpack.c.l.b16 %v517
    %v526 = vunpack.c.l.b16 %v518
    %v527 = vunpack.c.l.b16 %v519
    %v528 = vunpack.c.l.b16 %v520
    %v529 = vpack.c.b16 %v526, %v525
    %v530 = vpack.c.b16 %v528, %v527
    %v534 = vsel %vm228, %v516, 0
    %536 = vmatprep.subr.bf16.mxu0 0
    %537 = vmatpush1.bf16.msra.mxu0 %v529
    %538 = vmatprep.subr.bf16.mxu0 0
    %539 = vmatpush1.bf16.msra.mxu0 %v530
    %540 = vmatprep.subr.bf16.mxu0 0
    %541 = vmatpush1.bf16.msra.mxu0 0
    %542 = vmatprep.subr.bf16.mxu0 0
    %543 = vmatpush1.bf16.msra.mxu0 0
    %544 = vmatprep.subr.bf16.mxu0 0
    %545 = vmatpush1.bf16.msra.mxu0 0
    %546 = vmatprep.subr.bf16.mxu0 0
    %547 = vmatpush1.bf16.msra.mxu0 0
    %548 = vmatprep.subr.bf16.mxu0 0
    %549 = vmatpush1.bf16.msra.mxu0 0
    %550 = vmatprep.subr.bf16.mxu0 0
    %551 = vmatpush1.bf16.msra.mxu0 0
    %552 = vmatprep.subr.bf16.mxu0 0
    %553 = vmatpush1.bf16.msra.mxu0 0
    %554 = vmatprep.subr.bf16.mxu0 0
    %555 = vmatpush1.bf16.msra.mxu0 0
    %556 = vmatprep.subr.bf16.mxu0 0
    %557 = vmatpush1.bf16.msra.mxu0 0
    %558 = vmatprep.subr.bf16.mxu0 0
    %559 = vmatpush1.bf16.msra.mxu0 0
    %560 = vmatprep.subr.bf16.mxu0 0
    %561 = vmatpush1.bf16.msra.mxu0 0
    %562 = vmatprep.subr.bf16.mxu0 0
    %563 = vmatpush1.bf16.msra.mxu0 0
    %564 = vmatprep.subr.bf16.mxu0 0
    %565 = vmatpush1.bf16.msra.mxu0 0
    %566 = vmatprep.subr.bf16.mxu0 0
    %567 = vmatpush1.bf16.msra.mxu0 0
    %568 = vmatprep.mubr.bf16.mxu0 0
    %569 = vmatmul.mubr.bf16.gmra.mrb[0].mxu0 %v534
    %v570 = vpop.f32.mrb[0].mxu0
    %v571 = vadd.f32 0.0, %v570
    %v572 = vpop.f32.mrb[0].mxu0
    %v573 = vpop.f32.mrb[0].mxu0
    %v574 = vpop.f32.mrb[0].mxu0
    %575 = vdwg.mxu0
    %v576 = vadd.f32 %v510, %v571
    %v577 = vld [vmem:[#allocation17] sm:$0x1]
    %v579 = vlaneseq
    %v580 = vshrl.u32 %v579, 7
    %v581 = vsub.s32 0, %v580
    %v582 = vrot.slane %v577, %v581
    %v584 = vadd.f32 %v576, %v582
    %v585 = vld [vmem:[#allocation7] sm:$0x3]
    %v586 = vxor.u32 %v584, 2147483648
    %v587 = vmul.f32 %v586, 1.442695
    %v588 = vpow.pop %v587
    %v589 = vadd.f32 %v588, 1.0
    %v590 = vrcp.pop %v589
    %v591 = vmul.f32 1.0, %v590
    %v592 = vtanh.pop %v584
    %594 = vrot.lane.b32.xlu0 %v585, 32
    %v595 = vpop.permute.xlu0 %594
    %v597 = vmul.f32 %v591, %v595
    %599 = vrot.lane.b32.xlu0 %v592, 64
    %v600 = vpop.permute.xlu0 %599
    %v602 = vmul.f32 %v591, %v600
    %604 = vrot.lane.b32.xlu0 %v602, 32
    %v605 = vpop.permute.xlu0 %604
    %v607 = vadd.f32 %v597, %v605
    %v608 = vtanh.pop %v607
    %610 = vrot.lane.b32.xlu0 %v608, 64
    %v611 = vpop.permute.xlu0 %610
    %v613 = vmul.f32 %v591, %v611
    %615 = vrot.lane.b32.xlu0 %v613, 32
    %v616 = vpop.permute.xlu0 %615
    %vm618 = vcmask 254976
    %619 = vst.msk [vmem:[#allocation20] sm:$0x3] %vm618, %v616
    %621 = vrot.lane.b32.xlu0 %v607, 96
    %v622 = vpop.permute.xlu0 %621
    %624 = vst.msk [vmem:[#allocation21] sm:$0x3] %vm618, %v622
    %v625 = vpack.c.bf16 %v613, %v613
    %v626 = vld [vmem:[%s13] sm:$0xf]
    %v627 = vld [vmem:[%s13 + $0x4] sm:$0xf]
    %v628 = vld [vmem:[%s13 + $0x8] sm:$0xf]
    %v629 = vld [vmem:[%s13 + $0xc] sm:$0xf]
    %v630 = vld [vmem:[%s202] sm:$0x3]
    %v631 = vpack.c.bf16 %v630, %v630
    %v632 = vld [vmem:[#allocation19] sm:$0xf]
    %v633 = vld [vmem:[#allocation19 + $0x4] sm:$0xf]
    %v634 = vld [vmem:[#allocation19 + $0x8] sm:$0xf]
    %v635 = vld [vmem:[#allocation19 + $0xc] sm:$0xf]
    %v640 = vunpack.c.l.b16 %v632
    %v641 = vunpack.c.l.b16 %v633
    %v642 = vunpack.c.l.b16 %v634
    %v643 = vunpack.c.l.b16 %v635
    %v644 = vpack.c.b16 %v641, %v640
    %v645 = vpack.c.b16 %v643, %v642
    %v649 = vsel %vm228, %v631, 0
    %651 = vmatprep.subr.bf16.mxu0 0
    %652 = vmatpush1.bf16.msra.mxu0 %v644
    %653 = vmatprep.subr.bf16.mxu0 0
    %654 = vmatpush1.bf16.msra.mxu0 %v645
    %655 = vmatprep.subr.bf16.mxu0 0
    %656 = vmatpush1.bf16.msra.mxu0 0
    %657 = vmatprep.subr.bf16.mxu0 0
    %658 = vmatpush1.bf16.msra.mxu0 0
    %659 = vmatprep.subr.bf16.mxu0 0
    %660 = vmatpush1.bf16.msra.mxu0 0
    %661 = vmatprep.subr.bf16.mxu0 0
    %662 = vmatpush1.bf16.msra.mxu0 0
    %663 = vmatprep.subr.bf16.mxu0 0
    %664 = vmatpush1.bf16.msra.mxu0 0
    %665 = vmatprep.subr.bf16.mxu0 0
    %666 = vmatpush1.bf16.msra.mxu0 0
    %667 = vmatprep.subr.bf16.mxu0 0
    %668 = vmatpush1.bf16.msra.mxu0 0
    %669 = vmatprep.subr.bf16.mxu0 0
    %670 = vmatpush1.bf16.msra.mxu0 0
    %671 = vmatprep.subr.bf16.mxu0 0
    %672 = vmatpush1.bf16.msra.mxu0 0
    %673 = vmatprep.subr.bf16.mxu0 0
    %674 = vmatpush1.bf16.msra.mxu0 0
    %675 = vmatprep.subr.bf16.mxu0 0
    %676 = vmatpush1.bf16.msra.mxu0 0
    %677 = vmatprep.subr.bf16.mxu0 0
    %678 = vmatpush1.bf16.msra.mxu0 0
    %679 = vmatprep.subr.bf16.mxu0 0
    %680 = vmatpush1.bf16.msra.mxu0 0
    %681 = vmatprep.subr.bf16.mxu0 0
    %682 = vmatpush1.bf16.msra.mxu0 0
    %683 = vmatprep.mubr.bf16.mxu0 0
    %684 = vmatmul.mubr.bf16.gmra.mrb[0].mxu0 %v649
    %v685 = vpop.f32.mrb[0].mxu0
    %v686 = vadd.f32 0.0, %v685
    %v687 = vpop.f32.mrb[0].mxu0
    %v688 = vpop.f32.mrb[0].mxu0
    %v689 = vpop.f32.mrb[0].mxu0
    %690 = vdwg.mxu0
    %692 = vrot.lane.b32.xlu0 %v625, 32
    %v693 = vpop.permute.xlu0 %692
    %v698 = vunpack.c.l.b16 %v626
    %v699 = vunpack.c.l.b16 %v627
    %v700 = vunpack.c.l.b16 %v628
    %v701 = vunpack.c.l.b16 %v629
    %v702 = vpack.c.b16 %v699, %v698
    %v703 = vpack.c.b16 %v701, %v700
    %v707 = vsel %vm228, %v693, 0
    %709 = vmatprep.subr.bf16.mxu0 0
    %710 = vmatpush1.bf16.msra.mxu0 %v702
    %711 = vmatprep.subr.bf16.mxu0 0
    %712 = vmatpush1.bf16.msra.mxu0 %v703
    %713 = vmatprep.subr.bf16.mxu0 0
    %714 = vmatpush1.bf16.msra.mxu0 0
    %715 = vmatprep.subr.bf16.mxu0 0
    %716 = vmatpush1.bf16.msra.mxu0 0
    %717 = vmatprep.subr.bf16.mxu0 0
    %718 = vmatpush1.bf16.msra.mxu0 0
    %719 = vmatprep.subr.bf16.mxu0 0
    %720 = vmatpush1.bf16.msra.mxu0 0
    %721 = vmatprep.subr.bf16.mxu0 0
    %722 = vmatpush1.bf16.msra.mxu0 0
    %723 = vmatprep.subr.bf16.mxu0 0
    %724 = vmatpush1.bf16.msra.mxu0 0
    %725 = vmatprep.subr.bf16.mxu0 0
    %726 = vmatpush1.bf16.msra.mxu0 0
    %727 = vmatprep.subr.bf16.mxu0 0
    %728 = vmatpush1.bf16.msra.mxu0 0
    %729 = vmatprep.subr.bf16.mxu0 0
    %730 = vmatpush1.bf16.msra.mxu0 0
    %731 = vmatprep.subr.bf16.mxu0 0
    %732 = vmatpush1.bf16.msra.mxu0 0
    %733 = vmatprep.subr.bf16.mxu0 0
    %734 = vmatpush1.bf16.msra.mxu0 0
    %735 = vmatprep.subr.bf16.mxu0 0
    %736 = vmatpush1.bf16.msra.mxu0 0
    %737 = vmatprep.subr.bf16.mxu0 0
    %738 = vmatpush1.bf16.msra.mxu0 0
    %739 = vmatprep.subr.bf16.mxu0 0
    %740 = vmatpush1.bf16.msra.mxu0 0
    %741 = vmatprep.mubr.bf16.mxu0 0
    %742 = vmatmul.mubr.bf16.gmra.mrb[0].mxu0 %v707
    %v743 = vpop.f32.mrb[0].mxu0
    %v744 = vadd.f32 %v686, %v743
    %v745 = vpop.f32.mrb[0].mxu0
    %v746 = vpop.f32.mrb[0].mxu0
    %v747 = vpop.f32.mrb[0].mxu0
    %748 = vdwg.mxu0
    %v749 = vld [vmem:[%s15] sm:$0x1]
    %v751 = vlaneseq
    %v752 = vshrl.u32 %v751, 7
    %v753 = vsub.s32 0, %v752
    %v754 = vrot.slane %v749, %v753
    %v756 = vadd.f32 %v744, %v754
    %s757 = scalar_lea.vmem [#allocation7], 2
    %v758 = vld [vmem:[%s757] sm:$0x3]
    %v759 = vxor.u32 %v756, 2147483648
    %v760 = vmul.f32 %v759, 1.442695
    %v761 = vpow.pop %v760
    %v762 = vadd.f32 %v761, 1.0
    %v763 = vrcp.pop %v762
    %v764 = vmul.f32 1.0, %v763
    %v765 = vtanh.pop %v756
    %767 = vrot.lane.b32.xlu0 %v758, 32
    %v768 = vpop.permute.xlu0 %767
    %v770 = vmul.f32 %v764, %v768
    %772 = vrot.lane.b32.xlu0 %v765, 64
    %v773 = vpop.permute.xlu0 %772
    %v775 = vmul.f32 %v764, %v773
    %777 = vrot.lane.b32.xlu0 %v775, 32
    %v778 = vpop.permute.xlu0 %777
    %v780 = vadd.f32 %v770, %v778
    %v781 = vtanh.pop %v780
    %783 = vrot.lane.b32.xlu0 %v781, 64
    %v784 = vpop.permute.xlu0 %783
    %v786 = vmul.f32 %v764, %v784
    %788 = vrot.lane.b32.xlu0 %v786, 32
    %v789 = vpop.permute.xlu0 %788
    %s791 = scalar_lea.vmem [#allocation20], 2
    %792 = vst.msk [vmem:[%s791] sm:$0x3] %vm618, %v789
    %794 = vrot.lane.b32.xlu0 %v780, 96
    %v795 = vpop.permute.xlu0 %794
    %s797 = scalar_lea.vmem [#allocation21], 2
    %798 = vst.msk [vmem:[%s797] sm:$0x3] %vm618, %v795
    %v799 = vpack.c.bf16 %v786, %v786
    %v802 = vunpack.c.l.s4 1966171168
    %v803 = vunpack.c.0.s8 %v802
    %v804 = vlaneseq
    %v805 = vshrl.u32 %v804, 7
    %v806 = vsub.s32 %v803, %v805
    %v807 = vrot.slane %v799, %v806
    %v809 = vunpack.c.l.s4 1966171168
    %v810 = vunpack.c.0.s8 %v809
    %v811 = vlaneseq
    %v812 = vshrl.u32 %v811, 7
    %v813 = vsub.s32 %v810, %v812
    %v814 = vrot.slane %v807, %v813
    %815 = vrot.lane.b32.xlu0 %v814, 32
    %v816 = vpop.permute.xlu0 %815
    %vm818 = vcmask 253952
    %819 = vst.msk [vmem:[#allocation24] sm:$0x1] %vm818, %v816
    // Predicated region
    $region110: #{tpu_custom_call.1} parent=1 // pred_check
      _
    $region111: #{tpu_custom_call.1} parent=1 // pred_check_branch
      %821 = sbr.rel (0) target = $region113
    $region112: #{tpu_custom_call.1} parent=1 // pred_region
      %s823 = ssub.s32 64, 64
      %824 = vsyncadd [#allocation4], %s823
      %s825 = sshll.u32 [#allocation20], 4
      %s826 = int_to_ptr.vmem [resolvable:$true] %s825
      %831 = dma.vmem_to_hbm [thread:$0]  %s826, 64, %s16, [#allocation4], 32, 32, 2
    $region113: #{tpu_custom_call.1} parent=1 // pred_fallthru
      _
    // Predicated region
    $region114: #{tpu_custom_call.1} parent=1 // pred_check
      _
    $region115: #{tpu_custom_call.1} parent=1 // pred_check_branch
      %833 = sbr.rel (0) target = $region117
    $region116: #{tpu_custom_call.1} parent=1 // pred_region
      %s835 = ssub.s32 64, 64
      %836 = vsyncadd [#allocation22], %s835
      %s837 = sshll.u32 [#allocation21], 4
      %s838 = int_to_ptr.vmem [resolvable:$true] %s837
      %843 = dma.vmem_to_hbm [thread:$0]  %s838, 64, %s17, [#allocation22], 32, 32, 2
    $region117: #{tpu_custom_call.1} parent=1 // pred_fallthru
      _
    // Predicated region
    $region118: #{tpu_custom_call.1} parent=1 // pred_check
      _
    $region119: #{tpu_custom_call.1} parent=1 // pred_check_branch
      %845 = sbr.rel (0) target = $region121
    $region120: #{tpu_custom_call.1} parent=1 // pred_region
      %s847 = ssub.s32 32, 32
      %848 = vsyncadd [#allocation22], %s847
      %s850 = sshll.u32 [#allocation23], 4
      %s851 = int_to_ptr.vmem [resolvable:$true] %s850
      %853 = dma.vmem_to_hbm [thread:$0]  %s851, 32, %s18, [#allocation22]
    $region121: #{tpu_custom_call.1} parent=1 // pred_fallthru
      _
    // Predicated region
    $region122: #{tpu_custom_call.1} parent=1 // pred_check
      _
    $region123: #{tpu_custom_call.1} parent=1 // pred_check_branch
      %855 = sbr.rel (0) target = $region125
    $region124: #{tpu_custom_call.1} parent=1 // pred_region
      %s857 = ssub.s32 16, 16
      %858 = vsyncadd [#allocation25], %s857
      %s860 = sshll.u32 [#allocation24], 4
      %s861 = int_to_ptr.vmem [resolvable:$true] %s860
      %863 = dma.vmem_to_hbm [thread:$0]  %s861, 16, %s19, [#allocation25]
    $region125: #{tpu_custom_call.1} parent=1 // pred_fallthru
      _
    // Predicated region
    $region126: #{tpu_custom_call.1} parent=1 // pred_check
      _
    $region127: #{tpu_custom_call.1} parent=1 // pred_check_branch
      %865 = sbr.rel (0) target = $region129
    $region128: #{tpu_custom_call.1} parent=1 // pred_region
      %866 = dma.done [#allocation4], 64
    $region129: #{tpu_custom_call.1} parent=1 // pred_fallthru
      _
    // Predicated region
    $region130: #{tpu_custom_call.1} parent=1 // pred_check
      _
    $region131: #{tpu_custom_call.1} parent=1 // pred_check_branch
      %868 = sbr.rel (0) target = $region133
    $region132: #{tpu_custom_call.1} parent=1 // pred_region
      %869 = dma.done [#allocation22], 64
    $region133: #{tpu_custom_call.1} parent=1 // pred_fallthru
      _
    // Predicated region
    $region134: #{tpu_custom_call.1} parent=1 // pred_check
      _
    $region135: #{tpu_custom_call.1} parent=1 // pred_check_branch
      %871 = sbr.rel (0) target = $region137
    $region136: #{tpu_custom_call.1} parent=1 // pred_region
      %872 = dma.done [#allocation22], 32
    $region137: #{tpu_custom_call.1} parent=1 // pred_fallthru
      _
    // Predicated region
    $region138: #{tpu_custom_call.1} parent=1 // pred_check
      _
    $region139: #{tpu_custom_call.1} parent=1 // pred_check_branch
      %874 = sbr.rel (0) target = $region141
    $region140: #{tpu_custom_call.1} parent=1 // pred_region
      %875 = dma.done [#allocation25], 16
    $region141: #{tpu_custom_call.1} parent=1 // pred_fallthru
      _
    %876 = vsyncpa [#allocation3], 1
    %877 = vsyncpa [#allocation6], 1
    %878 = vsyncpa [#allocation9], 1
    %879 = vsyncpa [#allocation12], 1
    %880 = vsyncpa [#allocation15], 1
    %881 = vsyncpa [#allocation18], 1
    %882 = vsyncpa [#allocation4], 1
    %883 = vsyncpa [#allocation22], 1
    %884 = vsyncpa [#allocation25], 1

</llo_original>
